<compile_context>
chip_gen: v7x
topology: tpu7x:2x2x1
jax: 0.10.0
libtpu: 0.0.40
codegen_flags: <defaults>
</compile_context>

<pallas_src>
import functools

import jax
import jax.numpy as jnp
from jax.experimental import pallas as pl
from jax.experimental.pallas import tpu as pltpu


_SOFTPLUS_THRESHOLD = 20.0  # same threshold torch.nn.functional.softplus uses


def _mish(y):
    """Mish(y) = y * tanh(softplus(y)) with a single exp + one reciprocal.

    tanh(log(1 + e^y)) = ((1+e^y)^2 - 1) / ((1+e^y)^2 + 1)
                       = e^y (e^y + 2) / (e^y (e^y + 2) + 2)
    For y > 20 the factor is 1.0 to f32 precision -> pass y through unchanged.
    """
    e = jnp.exp(jnp.minimum(y, _SOFTPLUS_THRESHOLD))
    num = e * (e + 2.0)
    # Exact reciprocal keeps the kernel within 1e-5 of the torch reference;
    # approx=True (EUP vrcp) would be ~1e-4 rel error.
    t = num * pl.reciprocal(num + 2.0, approx=False)
    return jnp.where(y > _SOFTPLUS_THRESHOLD, y, y * t)


def _fused_mlp_kernel(*refs, num_layers):
    """refs = (x_ref, w0, b0, w1, b1, ..., w_{L-1}, b_{L-1}, o_ref)."""
    x_ref = refs[0]
    o_ref = refs[1 + 2 * num_layers]

    h = x_ref[...]
    for i in range(num_layers):                      # unrolled at trace time
        w_ref = refs[1 + 2 * i]
        b_ref = refs[2 + 2 * i]                      # (1, n) -> broadcasts over rows
        h = jnp.dot(h, w_ref[...], preferred_element_type=jnp.float32) + b_ref[...]
        if i < num_layers - 1:
            h = _mish(h)
    o_ref[...] = h.astype(o_ref.dtype)


def mlp_forward(x, params, *, m_tile=512):
    """Forward pass of MLPNetwork as one fused Pallas call.

    x: (batch, input_dim) float32.  params: list of (W (in,out), b (out,)) float32.
    """
    m, input_dim = x.shape
    num_layers = len(params)
    output_dim = params[-1][0].shape[1]

    if m <= m_tile:
        m_tile = m                       # small batch: one full-array block
    else:
        m_tile = (m_tile // 8) * 8       # keep the sublane (8) alignment when tiling
    grid = (pl.cdiv(m, m_tile),)

    # x / out tiled over batch; weights & biases VMEM-resident (constant block idx).
    in_specs = [pl.BlockSpec((m_tile, input_dim), lambda i: (i, 0))]
    flat_inputs = [x]

    flops = 0
    transcendentals = 0
    bytes_accessed = x.size * 4
    param_bytes = 0
    max_width = max(input_dim, output_dim)
    for li, (w, b) in enumerate(params):
        k, n = w.shape
        max_width = max(max_width, n)
        in_specs.append(pl.BlockSpec((k, n), lambda i: (0, 0)))
        in_specs.append(pl.BlockSpec((1, n), lambda i: (0, 0)))
        flat_inputs.append(w)
        flat_inputs.append(b.reshape(1, n))
        flops += 2 * m * k * n
        param_bytes += (w.size + b.size) * 4
        bytes_accessed += (w.size + b.size) * 4
        if li < num_layers - 1:
            transcendentals += 2 * m * n   # exp + reciprocal per hidden element
    bytes_accessed += m * output_dim * 4

    out_specs = pl.BlockSpec((m_tile, output_dim), lambda i: (i, 0))

    # Size the scoped-VMEM limit from the real footprint: resident params +
    # double-buffered x/out tiles + activation working set + headroom.
    tile_bytes = 2 * m_tile * (input_dim + output_dim) * 4     # double-buffered I/O
    act_bytes = 4 * m_tile * max_width * 4                      # activations / spill
    vmem_need = param_bytes + tile_bytes + act_bytes + (8 << 20)
    vmem_limit = int(max(32 << 20, min(64 << 20, vmem_need)))   # 64 MiB cap (v7x per-TC)

    # TODO(synk): for very large deployments, bf16 weight storage (f32 accumulation)
    # and padding hidden_dim to a multiple of 128 lanes would help further; both
    # change param dtypes/shapes so they are left out of this exact-semantics port.
    return pl.pallas_call(
        functools.partial(_fused_mlp_kernel, num_layers=num_layers),
        out_shape=jax.ShapeDtypeStruct((m, output_dim), jnp.float32),
        grid=grid,
        in_specs=in_specs,
        out_specs=out_specs,
        compiler_params=pltpu.CompilerParams(
            dimension_semantics=("parallel",),   # shard batch grid across v7x's 2 TCs
            vmem_limit_bytes=vmem_limit,
        ),
        cost_estimate=pl.CostEstimate(
            flops=flops,
            transcendentals=transcendentals,
            bytes_accessed=bytes_accessed,
        ),
    )(*flat_inputs)


def init_mlp_params(key, input_dim, hidden_dim, num_hidden_layers, output_dim):
    """Deterministic init mimicking nn.Linear default U[-1/sqrt(fan_in), 1/sqrt(fan_in)].

    Weights are stored transposed: shape (in_features, out_features).
    """
    dims = [input_dim] + [hidden_dim] * num_hidden_layers + [output_dim]
    params = []
    for i in range(len(dims) - 1):
        fan_in, fan_out = dims[i], dims[i + 1]
        key, kw, kb = jax.random.split(key, 3)
        bound = 1.0 / jnp.sqrt(jnp.float32(fan_in))
        w = jax.random.uniform(kw, (fan_in, fan_out), jnp.float32, -bound, bound)
        b = jax.random.uniform(kb, (fan_out,), jnp.float32, -bound, bound)
        params.append((w, b))
    return params


if __name__ == "__main__":
    # Small shapes consistent with the module: batch=8, input_dim=16,
    # hidden_dim=32, num_hidden_layers=2, output_dim=1.
    batch, input_dim, hidden_dim, num_hidden_layers, output_dim = 8, 16, 32, 2, 1

    key = jax.random.PRNGKey(0)
    key, kx = jax.random.split(key)
    x = jax.random.normal(kx, (batch, input_dim), dtype=jnp.float32)

    params = init_mlp_params(key, input_dim, hidden_dim, num_hidden_layers, output_dim)

    out = mlp_forward(x, params)
    out = jax.block_until_ready(out)

    assert out.shape == (batch, output_dim), out.shape
    assert out.dtype == jnp.float32

    # Pure-JAX reference (exact Mish = x * tanh(softplus(x))).
    def ref_forward(x, params):
        h = x
        for idx, (w, b) in enumerate(params):
            h = h @ w + b
            if idx < len(params) - 1:
                h = h * jnp.tanh(jax.nn.softplus(h))
        return h

    ref = ref_forward(x, params)
    assert jnp.allclose(out, ref, atol=1e-5, rtol=1e-5), (out, ref)

    print("KERNEL_OK")
</pallas_src>

<mosaic_0001>
module attributes {stable_mosaic.version = 11 : i64} {
  func.func @_fused_mlp_kernel(%arg0: i32, %arg1: memref<8x16xf32, #tpu.memory_space<vmem>>, %arg2: memref<16x32xf32, #tpu.memory_space<vmem>>, %arg3: memref<1x32xf32, #tpu.memory_space<vmem>>, %arg4: memref<32x32xf32, #tpu.memory_space<vmem>>, %arg5: memref<1x32xf32, #tpu.memory_space<vmem>>, %arg6: memref<32x1xf32, #tpu.memory_space<vmem>>, %arg7: memref<1x1xf32, #tpu.memory_space<vmem>>, %arg8: memref<8x1xf32, #tpu.memory_space<vmem>>) attributes {dimension_semantics = [#tpu.dimension_semantics<parallel>], iteration_bounds = array<i64: 1>, scalar_prefetch = 0 : i64, scratch_operands = 0 : i64, tpu.core_type = #tpu.core_type<tc>, window_params = [{transform_indices = @transform_0, window_bounds = array<i64: 8, 16>}, {pipeline_mode = #tpu.pipeline_mode<synchronous>, transform_indices = @transform_1, window_bounds = array<i64: 16, 32>}, {pipeline_mode = #tpu.pipeline_mode<synchronous>, transform_indices = @transform_2, window_bounds = array<i64: 1, 32>}, {pipeline_mode = #tpu.pipeline_mode<synchronous>, transform_indices = @transform_3, window_bounds = array<i64: 32, 32>}, {pipeline_mode = #tpu.pipeline_mode<synchronous>, transform_indices = @transform_4, window_bounds = array<i64: 1, 32>}, {pipeline_mode = #tpu.pipeline_mode<synchronous>, transform_indices = @transform_5, window_bounds = array<i64: 32, 1>}, {pipeline_mode = #tpu.pipeline_mode<synchronous>, transform_indices = @transform_6, window_bounds = array<i64: 1, 1>}, {transform_indices = @transform_7, window_bounds = array<i64: 8, 1>}]} {
    %c0 = arith.constant 0 : index
    %c0_0 = arith.constant 0 : index
    %0 = vector.load %arg1[%c0, %c0_0] : memref<8x16xf32, #tpu.memory_space<vmem>>, vector<8x16xf32>
    %c0_1 = arith.constant 0 : index
    %c0_2 = arith.constant 0 : index
    %1 = vector.load %arg2[%c0_1, %c0_2] : memref<16x32xf32, #tpu.memory_space<vmem>>, vector<16x32xf32>
    %cst = arith.constant dense<0.000000e+00> : vector<8x32xf32>
    %2 = tpu.matmul %0, %1, %cst {dimension_numbers = #tpu.dot_dimension_numbers<[1], [0], [0], [1], [0, 0, 1, 1], [], []>} : vector<8x16xf32>, vector<16x32xf32>, vector<8x32xf32> -> vector<8x32xf32>
    %c0_3 = arith.constant 0 : index
    %c0_4 = arith.constant 0 : index
    %3 = vector.load %arg3[%c0_3, %c0_4] : memref<1x32xf32, #tpu.memory_space<vmem>>, vector<1x32xf32>
    %4 = vector.broadcast %3 : vector<1x32xf32> to vector<8x32xf32>
    %5 = arith.addf %2, %4 : vector<8x32xf32>
    %cst_5 = arith.constant 2.000000e+01 : f32
    %6 = vector.broadcast %cst_5 : f32 to vector<8x32xf32>
    %7 = arith.minimumf %5, %6 : vector<8x32xf32>
    %8 = math.exp %7 : vector<8x32xf32>
    %cst_6 = arith.constant 2.000000e+00 : f32
    %9 = vector.broadcast %cst_6 : f32 to vector<8x32xf32>
    %10 = arith.addf %8, %9 : vector<8x32xf32>
    %11 = arith.mulf %8, %10 : vector<8x32xf32>
    %cst_7 = arith.constant 2.000000e+00 : f32
    %12 = vector.broadcast %cst_7 : f32 to vector<8x32xf32>
    %13 = arith.addf %11, %12 : vector<8x32xf32>
    %14 = tpu.reciprocal %13 : vector<8x32xf32> -> vector<8x32xf32>
    %15 = arith.mulf %11, %14 : vector<8x32xf32>
    %cst_8 = arith.constant 2.000000e+01 : f32
    %16 = vector.broadcast %cst_8 : f32 to vector<8x32xf32>
    %17 = arith.cmpf ogt, %5, %16 : vector<8x32xf32>
    %18 = arith.mulf %5, %15 : vector<8x32xf32>
    %19 = arith.select %17, %5, %18 : vector<8x32xi1>, vector<8x32xf32>
    %c0_9 = arith.constant 0 : index
    %c0_10 = arith.constant 0 : index
    %20 = vector.load %arg4[%c0_9, %c0_10] : memref<32x32xf32, #tpu.memory_space<vmem>>, vector<32x32xf32>
    %cst_11 = arith.constant dense<0.000000e+00> : vector<8x32xf32>
    %21 = tpu.matmul %19, %20, %cst_11 {dimension_numbers = #tpu.dot_dimension_numbers<[1], [0], [0], [1], [0, 0, 1, 1], [], []>} : vector<8x32xf32>, vector<32x32xf32>, vector<8x32xf32> -> vector<8x32xf32>
    %c0_12 = arith.constant 0 : index
    %c0_13 = arith.constant 0 : index
    %22 = vector.load %arg5[%c0_12, %c0_13] : memref<1x32xf32, #tpu.memory_space<vmem>>, vector<1x32xf32>
    %23 = vector.broadcast %22 : vector<1x32xf32> to vector<8x32xf32>
    %24 = arith.addf %21, %23 : vector<8x32xf32>
    %cst_14 = arith.constant 2.000000e+01 : f32
    %25 = vector.broadcast %cst_14 : f32 to vector<8x32xf32>
    %26 = arith.minimumf %24, %25 : vector<8x32xf32>
    %27 = math.exp %26 : vector<8x32xf32>
    %cst_15 = arith.constant 2.000000e+00 : f32
    %28 = vector.broadcast %cst_15 : f32 to vector<8x32xf32>
    %29 = arith.addf %27, %28 : vector<8x32xf32>
    %30 = arith.mulf %27, %29 : vector<8x32xf32>
    %cst_16 = arith.constant 2.000000e+00 : f32
    %31 = vector.broadcast %cst_16 : f32 to vector<8x32xf32>
    %32 = arith.addf %30, %31 : vector<8x32xf32>
    %33 = tpu.reciprocal %32 : vector<8x32xf32> -> vector<8x32xf32>
    %34 = arith.mulf %30, %33 : vector<8x32xf32>
    %cst_17 = arith.constant 2.000000e+01 : f32
    %35 = vector.broadcast %cst_17 : f32 to vector<8x32xf32>
    %36 = arith.cmpf ogt, %24, %35 : vector<8x32xf32>
    %37 = arith.mulf %24, %34 : vector<8x32xf32>
    %38 = arith.select %36, %24, %37 : vector<8x32xi1>, vector<8x32xf32>
    %c0_18 = arith.constant 0 : index
    %c0_19 = arith.constant 0 : index
    %39 = vector.load %arg6[%c0_18, %c0_19] : memref<32x1xf32, #tpu.memory_space<vmem>>, vector<32x1xf32>
    %cst_20 = arith.constant dense<0.000000e+00> : vector<8x1xf32>
    %40 = tpu.matmul %38, %39, %cst_20 {dimension_numbers = #tpu.dot_dimension_numbers<[1], [0], [0], [1], [0, 0, 1, 1], [], []>} : vector<8x32xf32>, vector<32x1xf32>, vector<8x1xf32> -> vector<8x1xf32>
    %c0_21 = arith.constant 0 : index
    %c0_22 = arith.constant 0 : index
    %41 = vector.load %arg7[%c0_21, %c0_22] : memref<1x1xf32, #tpu.memory_space<vmem>>, vector<1x1xf32>
    %42 = vector.broadcast %41 : vector<1x1xf32> to vector<8x1xf32>
    %43 = arith.addf %40, %42 : vector<8x1xf32>
    %c0_23 = arith.constant 0 : index
    %c0_24 = arith.constant 0 : index
    %44 = vector.load %arg8[%c0_23, %c0_24] : memref<8x1xf32, #tpu.memory_space<vmem>>, vector<8x1xf32>
    tpu.vector_store %arg8[%c0_23, %c0_24], %43 {strides = array<i32>} : memref<8x1xf32, #tpu.memory_space<vmem>>, vector<8x1xf32>,
    return
  }
  func.func @transform_0(%arg0: i32) -> (i32, i32) {
    %c0_i32 = arith.constant 0 : i32
    %c0_i32_0 = arith.constant 0 : i32
    return %arg0, %c0_i32 : i32, i32
  }
  func.func @transform_1(%arg0: i32) -> (i32, i32) {
    %c0_i32 = arith.constant 0 : i32
    %c0_i32_0 = arith.constant 0 : i32
    %c0_i32_1 = arith.constant 0 : i32
    return %c0_i32, %c0_i32_0 : i32, i32
  }
  func.func @transform_2(%arg0: i32) -> (i32, i32) {
    %c0_i32 = arith.constant 0 : i32
    %c0_i32_0 = arith.constant 0 : i32
    %c0_i32_1 = arith.constant 0 : i32
    return %c0_i32, %c0_i32_0 : i32, i32
  }
  func.func @transform_3(%arg0: i32) -> (i32, i32) {
    %c0_i32 = arith.constant 0 : i32
    %c0_i32_0 = arith.constant 0 : i32
    %c0_i32_1 = arith.constant 0 : i32
    return %c0_i32, %c0_i32_0 : i32, i32
  }
  func.func @transform_4(%arg0: i32) -> (i32, i32) {
    %c0_i32 = arith.constant 0 : i32
    %c0_i32_0 = arith.constant 0 : i32
    %c0_i32_1 = arith.constant 0 : i32
    return %c0_i32, %c0_i32_0 : i32, i32
  }
  func.func @transform_5(%arg0: i32) -> (i32, i32) {
    %c0_i32 = arith.constant 0 : i32
    %c0_i32_0 = arith.constant 0 : i32
    %c0_i32_1 = arith.constant 0 : i32
    return %c0_i32, %c0_i32_0 : i32, i32
  }
  func.func @transform_6(%arg0: i32) -> (i32, i32) {
    %c0_i32 = arith.constant 0 : i32
    %c0_i32_0 = arith.constant 0 : i32
    %c0_i32_1 = arith.constant 0 : i32
    return %c0_i32, %c0_i32_0 : i32, i32
  }
  func.func @transform_7(%arg0: i32) -> (i32, i32) {
    %c0_i32 = arith.constant 0 : i32
    %c0_i32_0 = arith.constant 0 : i32
    return %arg0, %c0_i32 : i32, i32
  }
}

</mosaic_0001>

<llo_original>
// kernel: tpu_custom_call.1
$region0: #{tpu_custom_call.1}
  #allocation0 [shape = 'u32[]', space=smem, size = 0x4, offset = 0x4, fixed_abs, tag = 'smem constant byte address 0x4 - core index']
  #allocation1 [shape = 'u32[144,128]{1,0:T(1,128)}', space=vmem, size = 0x12000, scoped, tag = 'internal scratch']
  #allocation2 [shape = 'f32[1,1]{1,0:T(1,128)S(1)}', space=vmem, size = 0x200, scoped, tag = 'scoped memory for tpu_custom_call.1']
  %s0 = inlined_call_operand.hbm [shape: f32[8,16], index: 0, kind: input, shape index: {}]
  %s1 = inlined_call_operand.vmem [shape: f32[16,32], index: 1, kind: input, shape index: {}]
  %s2 = inlined_call_operand.hbm [shape: f32[1,32], index: 2, kind: input, shape index: {}]
  %s3 = inlined_call_operand.vmem [shape: f32[32,32], index: 3, kind: input, shape index: {}]
  %s4 = inlined_call_operand.vmem [shape: f32[1,32], index: 4, kind: input, shape index: {}]
  %s5 = inlined_call_operand.vmem [shape: f32[32,1], index: 5, kind: input, shape index: {}]
  %s6 = inlined_call_operand.<no memory space> [shape: f32[1,1], index: 6, kind: input, shape index: {}]
  %s7 = inlined_call_operand.vmem [shape: f32[8,1], index: 7, kind: output, shape index: {}]
  %s8 = sld [smem:[#allocation0]]
  $region46: #{tpu_custom_call.1} parent=0
    _
  %s10 = ssub.s32 1, %s8
  %s11 = scalar_select 0, %s10, %s8
  %v12 = vstv %s6
  %13 = vst [vmem:[#allocation2] sm:$0x1] %v12
  $region1: #{tpu_custom_call.1} parent=0
    #allocation3 [shape = 'u8[4096]{0}', space=vmem, size = 0x1000, scoped, tag = 'input window, operand 0, single buffered']
    #allocation4 [shape = 's32[1]{0}', space=sflag, size = 0x4, scoped, tag = 'scoped memory for tpu_custom_call.1']
    #allocation5 [shape = 'u8[512]{0}', space=vmem, size = 0x400, scoped, tag = 'input window, operand 2, single buffered']
    #allocation6 [shape = 's32[1]{0}', space=sflag, size = 0x4, scoped, tag = 'scoped memory for tpu_custom_call.1']
    %14 = vsyncpa [#allocation4], 0
    %15 = vsyncpa [#allocation6], 0
    // Predicated region
    $region2: #{tpu_custom_call.1} parent=1 // pred_check
      _
    $region3: #{tpu_custom_call.1} parent=1 // pred_check_branch
      %17 = sbr.rel (0) target = $region5
    $region4: #{tpu_custom_call.1} parent=1 // pred_region
      %s19 = ssub.s32 128, 128
      %20 = vsyncadd [#allocation4], %s19
      %s22 = sshll.u32 [#allocation3], 4
      %s23 = int_to_ptr.vmem [resolvable:$true] %s22
      %25 = dma.hbm_to_vmem [thread:$0]  %s0, 128, %s23, [#allocation4]
    $region5: #{tpu_custom_call.1} parent=1 // pred_fallthru
      _
    // Predicated region
    $region6: #{tpu_custom_call.1} parent=1 // pred_check
      _
    $region7: #{tpu_custom_call.1} parent=1 // pred_check_branch
      %27 = sbr.rel (0) target = $region9
    $region8: #{tpu_custom_call.1} parent=1 // pred_region
      _
    $region9: #{tpu_custom_call.1} parent=1 // pred_fallthru
      _
    // Predicated region
    $region10: #{tpu_custom_call.1} parent=1 // pred_check
      _
    $region11: #{tpu_custom_call.1} parent=1 // pred_check_branch
      %29 = sbr.rel (0) target = $region13
    $region12: #{tpu_custom_call.1} parent=1 // pred_region
      %s31 = ssub.s32 16, 16
      %32 = vsyncadd [#allocation6], %s31
      %s34 = sshll.u32 [#allocation5], 4
      %s35 = int_to_ptr.vmem [resolvable:$true] %s34
      %37 = dma.hbm_to_vmem [thread:$0]  %s2, 16, %s35, [#allocation6]
    $region13: #{tpu_custom_call.1} parent=1 // pred_fallthru
      _
    // Predicated region
    $region14: #{tpu_custom_call.1} parent=1 // pred_check
      _
    $region15: #{tpu_custom_call.1} parent=1 // pred_check_branch
      %39 = sbr.rel (0) target = $region17
    $region16: #{tpu_custom_call.1} parent=1 // pred_region
      _
    $region17: #{tpu_custom_call.1} parent=1 // pred_fallthru
      _
    // Predicated region
    $region18: #{tpu_custom_call.1} parent=1 // pred_check
      _
    $region19: #{tpu_custom_call.1} parent=1 // pred_check_branch
      %41 = sbr.rel (0) target = $region21
    $region20: #{tpu_custom_call.1} parent=1 // pred_region
      _
    $region21: #{tpu_custom_call.1} parent=1 // pred_fallthru
      _
    // Predicated region
    $region22: #{tpu_custom_call.1} parent=1 // pred_check
      _
    $region23: #{tpu_custom_call.1} parent=1 // pred_check_branch
      %43 = sbr.rel (0) target = $region25
    $region24: #{tpu_custom_call.1} parent=1 // pred_region
      _
    $region25: #{tpu_custom_call.1} parent=1 // pred_fallthru
      _
    // Predicated region
    $region26: #{tpu_custom_call.1} parent=1 // pred_check
      _
    $region27: #{tpu_custom_call.1} parent=1 // pred_check_branch
      %45 = sbr.rel (0) target = $region29
    $region28: #{tpu_custom_call.1} parent=1 // pred_region
      _
    $region29: #{tpu_custom_call.1} parent=1 // pred_fallthru
      _
    // Predicated region
    $region30: #{tpu_custom_call.1} parent=1 // pred_check
      _
    $region31: #{tpu_custom_call.1} parent=1 // pred_check_branch
      %47 = sbr.rel (0) target = $region33
    $region32: #{tpu_custom_call.1} parent=1 // pred_region
      %48 = dma.done [#allocation4], 128
    $region33: #{tpu_custom_call.1} parent=1 // pred_fallthru
      _
    // Predicated region
    $region34: #{tpu_custom_call.1} parent=1 // pred_check
      _
    $region35: #{tpu_custom_call.1} parent=1 // pred_check_branch
      %50 = sbr.rel (0) target = $region37
    $region36: #{tpu_custom_call.1} parent=1 // pred_region
      %51 = dma.done [#allocation6], 16
    $region37: #{tpu_custom_call.1} parent=1 // pred_fallthru
      _
    %v52 = vld [vmem:[#allocation3] sm:$0xff]
    %v53 = vld [vmem:[%s1] sm:$0xff]
    %v54 = vld [vmem:[%s1 + $0x8] sm:$0xff]
    %v55 = vld [vmem:[#allocation5] sm:$0x1]
    %v57 = vlaneseq
    %v58 = vshrl.u32 %v57, 7
    %v59 = vsub.s32 0, %v58
    %v60 = vrot.slane %v55, %v59
    %vm62 = vcmask 130048
    %v64 = vsel %vm62, %v52, 0
    %66 = vmatprep.subr.mxu0 0.0
    %67 = vmatpush1.msra.mxu0 %v53
    %68 = vmatprep.subr.mxu0 0.0
    %69 = vmatpush1.msra.mxu0 %v54
    %70 = vmatprep.subr.mxu0 0.0
    %71 = vmatpush1.msra.mxu0 0.0
    %72 = vmatprep.subr.mxu0 0.0
    %73 = vmatpush1.msra.mxu0 0.0
    %74 = vmatprep.subr.mxu0 0.0
    %75 = vmatpush1.msra.mxu0 0.0
    %76 = vmatprep.subr.mxu0 0.0
    %77 = vmatpush1.msra.mxu0 0.0
    %78 = vmatprep.subr.mxu0 0.0
    %79 = vmatpush1.msra.mxu0 0.0
    %80 = vmatprep.subr.mxu0 0.0
    %81 = vmatpush1.msra.mxu0 0.0
    %82 = vmatprep.subr.mxu0 0.0
    %83 = vmatpush1.msra.mxu0 0.0
    %84 = vmatprep.subr.mxu0 0.0
    %85 = vmatpush1.msra.mxu0 0.0
    %86 = vmatprep.subr.mxu0 0.0
    %87 = vmatpush1.msra.mxu0 0.0
    %88 = vmatprep.subr.mxu0 0.0
    %89 = vmatpush1.msra.mxu0 0.0
    %90 = vmatprep.subr.mxu0 0.0
    %91 = vmatpush1.msra.mxu0 0.0
    %92 = vmatprep.subr.mxu0 0.0
    %93 = vmatpush1.msra.mxu0 0.0
    %94 = vmatprep.subr.mxu0 0.0
    %95 = vmatpush1.msra.mxu0 0.0
    %96 = vmatprep.subr.mxu0 0.0
    %97 = vmatpush1.msra.mxu0 0.0
    %98 = vmatprep.subr.mxu0 0.0
    %99 = vmatpush1.msra.mxu0 0.0
    %100 = vmatprep.subr.mxu0 0.0
    %101 = vmatpush1.msra.mxu0 0.0
    %102 = vmatprep.subr.mxu0 0.0
    %103 = vmatpush1.msra.mxu0 0.0
    %104 = vmatprep.subr.mxu0 0.0
    %105 = vmatpush1.msra.mxu0 0.0
    %106 = vmatprep.subr.mxu0 0.0
    %107 = vmatpush1.msra.mxu0 0.0
    %108 = vmatprep.subr.mxu0 0.0
    %109 = vmatpush1.msra.mxu0 0.0
    %110 = vmatprep.subr.mxu0 0.0
    %111 = vmatpush1.msra.mxu0 0.0
    %112 = vmatprep.subr.mxu0 0.0
    %113 = vmatpush1.msra.mxu0 0.0
    %114 = vmatprep.subr.mxu0 0.0
    %115 = vmatpush1.msra.mxu0 0.0
    %116 = vmatprep.subr.mxu0 0.0
    %117 = vmatpush1.msra.mxu0 0.0
    %118 = vmatprep.subr.mxu0 0.0
    %119 = vmatpush1.msra.mxu0 0.0
    %120 = vmatprep.subr.mxu0 0.0
    %121 = vmatpush1.msra.mxu0 0.0
    %122 = vmatprep.subr.mxu0 0.0
    %123 = vmatpush1.msra.mxu0 0.0
    %124 = vmatprep.subr.mxu0 0.0
    %125 = vmatpush1.msra.mxu0 0.0
    %126 = vmatprep.subr.mxu0 0.0
    %127 = vmatpush1.msra.mxu0 0.0
    %128 = vmatprep.subr.mxu0 0.0
    %129 = vmatpush1.msra.mxu0 0.0
    %130 = vmatprep.mubr.f32.mxu0 0.0
    %131 = vmatmul.mubr.f32.gmra.mrb[0].mxu0 %v64
    %v132 = vpop.f32.mrb[0].mxu0
    %v133 = vadd.f32 %v60, %v132
    %v134 = vpop.f32.mrb[0].mxu0
    %135 = vdwg.mxu0
    %v136 = vmin.f32 %v133, 20.0
    %v137 = vmul.f32 %v136, 1.442695
    %v138 = vpow.pop %v137
    %v139 = vadd.f32 %v138, 2.0
    %v140 = vmul.f32 %v138, %v139
    %v141 = vadd.f32 %v140, 2.0
    %v142 = vrcp.pop %v141
    %v143 = vmul.f32 %v140, %v142
    %vm144 = vcmp.gt.f32.partialorder %v133, 20.0
    %v145 = vmul.f32 %v133, %v143
    %v146 = vsel %vm144, %v133, %v145
    %v147 = vld [vmem:[%s3] sm:$0xff]
    %v148 = vld [vmem:[%s3 + $0x8] sm:$0xff]
    %v149 = vld [vmem:[%s3 + $0x10] sm:$0xff]
    %v150 = vld [vmem:[%s3 + $0x18] sm:$0xff]
    %v151 = vld [vmem:[%s4] sm:$0x1]
    %v153 = vlaneseq
    %v154 = vshrl.u32 %v153, 7
    %v155 = vsub.s32 0, %v154
    %v156 = vrot.slane %v151, %v155
    %vm158 = vcmask 261120
    %v160 = vsel %vm158, %v146, 0
    %162 = vmatprep.subr.mxu0 0.0
    %163 = vmatpush1.msra.mxu0 %v147
    %164 = vmatprep.subr.mxu0 0.0
    %165 = vmatpush1.msra.mxu0 %v148
    %166 = vmatprep.subr.mxu0 0.0
    %167 = vmatpush1.msra.mxu0 %v149
    %168 = vmatprep.subr.mxu0 0.0
    %169 = vmatpush1.msra.mxu0 %v150
    %170 = vmatprep.subr.mxu0 0.0
    %171 = vmatpush1.msra.mxu0 0.0
    %172 = vmatprep.subr.mxu0 0.0
    %173 = vmatpush1.msra.mxu0 0.0
    %174 = vmatprep.subr.mxu0 0.0
    %175 = vmatpush1.msra.mxu0 0.0
    %176 = vmatprep.subr.mxu0 0.0
    %177 = vmatpush1.msra.mxu0 0.0
    %178 = vmatprep.subr.mxu0 0.0
    %179 = vmatpush1.msra.mxu0 0.0
    %180 = vmatprep.subr.mxu0 0.0
    %181 = vmatpush1.msra.mxu0 0.0
    %182 = vmatprep.subr.mxu0 0.0
    %183 = vmatpush1.msra.mxu0 0.0
    %184 = vmatprep.subr.mxu0 0.0
    %185 = vmatpush1.msra.mxu0 0.0
    %186 = vmatprep.subr.mxu0 0.0
    %187 = vmatpush1.msra.mxu0 0.0
    %188 = vmatprep.subr.mxu0 0.0
    %189 = vmatpush1.msra.mxu0 0.0
    %190 = vmatprep.subr.mxu0 0.0
    %191 = vmatpush1.msra.mxu0 0.0
    %192 = vmatprep.subr.mxu0 0.0
    %193 = vmatpush1.msra.mxu0 0.0
    %194 = vmatprep.subr.mxu0 0.0
    %195 = vmatpush1.msra.mxu0 0.0
    %196 = vmatprep.subr.mxu0 0.0
    %197 = vmatpush1.msra.mxu0 0.0
    %198 = vmatprep.subr.mxu0 0.0
    %199 = vmatpush1.msra.mxu0 0.0
    %200 = vmatprep.subr.mxu0 0.0
    %201 = vmatpush1.msra.mxu0 0.0
    %202 = vmatprep.subr.mxu0 0.0
    %203 = vmatpush1.msra.mxu0 0.0
    %204 = vmatprep.subr.mxu0 0.0
    %205 = vmatpush1.msra.mxu0 0.0
    %206 = vmatprep.subr.mxu0 0.0
    %207 = vmatpush1.msra.mxu0 0.0
    %208 = vmatprep.subr.mxu0 0.0
    %209 = vmatpush1.msra.mxu0 0.0
    %210 = vmatprep.subr.mxu0 0.0
    %211 = vmatpush1.msra.mxu0 0.0
    %212 = vmatprep.subr.mxu0 0.0
    %213 = vmatpush1.msra.mxu0 0.0
    %214 = vmatprep.subr.mxu0 0.0
    %215 = vmatpush1.msra.mxu0 0.0
    %216 = vmatprep.subr.mxu0 0.0
    %217 = vmatpush1.msra.mxu0 0.0
    %218 = vmatprep.subr.mxu0 0.0
    %219 = vmatpush1.msra.mxu0 0.0
    %220 = vmatprep.subr.mxu0 0.0
    %221 = vmatpush1.msra.mxu0 0.0
    %222 = vmatprep.subr.mxu0 0.0
    %223 = vmatpush1.msra.mxu0 0.0
    %224 = vmatprep.subr.mxu0 0.0
    %225 = vmatpush1.msra.mxu0 0.0
    %226 = vmatprep.mubr.f32.mxu0 0.0
    %227 = vmatmul.mubr.f32.gmra.mrb[0].mxu0 %v160
    %v228 = vpop.f32.mrb[0].mxu0
    %v229 = vadd.f32 %v156, %v228
    %v230 = vpop.f32.mrb[0].mxu0
    %231 = vdwg.mxu0
    %v232 = vmin.f32 %v229, 20.0
    %v233 = vmul.f32 %v232, 1.442695
    %v234 = vpow.pop %v233
    %v235 = vadd.f32 %v234, 2.0
    %v236 = vmul.f32 %v234, %v235
    %v237 = vadd.f32 %v236, 2.0
    %v238 = vrcp.pop %v237
    %v239 = vmul.f32 %v236, %v238
    %vm240 = vcmp.gt.f32.partialorder %v229, 20.0
    %v241 = vmul.f32 %v229, %v239
    %v242 = vsel %vm240, %v229, %v241
    %v243 = vld [vmem:[%s5] sm:$0xff]
    %v244 = vld [vmem:[%s5 + $0x8] sm:$0xff]
    %v245 = vld [vmem:[%s5 + $0x10] sm:$0xff]
    %v246 = vld [vmem:[%s5 + $0x18] sm:$0xff]
    %v247 = vld [vmem:[#allocation2] sm:$0x1]
    %v249 = vlaneseq
    %v250 = vshrl.u32 %v249, 7
    %v251 = vsub.s32 0, %v250
    %v252 = vrot.slane %v247, %v251
    %v255 = vsel %vm158, %v242, 0
    %257 = vmatprep.subr.mxu0 0.0
    %258 = vmatpush1.msra.mxu0 %v243
    %259 = vmatprep.subr.mxu0 0.0
    %260 = vmatpush1.msra.mxu0 %v244
    %261 = vmatprep.subr.mxu0 0.0
    %262 = vmatpush1.msra.mxu0 %v245
    %263 = vmatprep.subr.mxu0 0.0
    %264 = vmatpush1.msra.mxu0 %v246
    %265 = vmatprep.subr.mxu0 0.0
    %266 = vmatpush1.msra.mxu0 0.0
    %267 = vmatprep.subr.mxu0 0.0
    %268 = vmatpush1.msra.mxu0 0.0
    %269 = vmatprep.subr.mxu0 0.0
    %270 = vmatpush1.msra.mxu0 0.0
    %271 = vmatprep.subr.mxu0 0.0
    %272 = vmatpush1.msra.mxu0 0.0
    %273 = vmatprep.subr.mxu0 0.0
    %274 = vmatpush1.msra.mxu0 0.0
    %275 = vmatprep.subr.mxu0 0.0
    %276 = vmatpush1.msra.mxu0 0.0
    %277 = vmatprep.subr.mxu0 0.0
    %278 = vmatpush1.msra.mxu0 0.0
    %279 = vmatprep.subr.mxu0 0.0
    %280 = vmatpush1.msra.mxu0 0.0
    %281 = vmatprep.subr.mxu0 0.0
    %282 = vmatpush1.msra.mxu0 0.0
    %283 = vmatprep.subr.mxu0 0.0
    %284 = vmatpush1.msra.mxu0 0.0
    %285 = vmatprep.subr.mxu0 0.0
    %286 = vmatpush1.msra.mxu0 0.0
    %287 = vmatprep.subr.mxu0 0.0
    %288 = vmatpush1.msra.mxu0 0.0
    %289 = vmatprep.subr.mxu0 0.0
    %290 = vmatpush1.msra.mxu0 0.0
    %291 = vmatprep.subr.mxu0 0.0
    %292 = vmatpush1.msra.mxu0 0.0
    %293 = vmatprep.subr.mxu0 0.0
    %294 = vmatpush1.msra.mxu0 0.0
    %295 = vmatprep.subr.mxu0 0.0
    %296 = vmatpush1.msra.mxu0 0.0
    %297 = vmatprep.subr.mxu0 0.0
    %298 = vmatpush1.msra.mxu0 0.0
    %299 = vmatprep.subr.mxu0 0.0
    %300 = vmatpush1.msra.mxu0 0.0
    %301 = vmatprep.subr.mxu0 0.0
    %302 = vmatpush1.msra.mxu0 0.0
    %303 = vmatprep.subr.mxu0 0.0
    %304 = vmatpush1.msra.mxu0 0.0
    %305 = vmatprep.subr.mxu0 0.0
    %306 = vmatpush1.msra.mxu0 0.0
    %307 = vmatprep.subr.mxu0 0.0
    %308 = vmatpush1.msra.mxu0 0.0
    %309 = vmatprep.subr.mxu0 0.0
    %310 = vmatpush1.msra.mxu0 0.0
    %311 = vmatprep.subr.mxu0 0.0
    %312 = vmatpush1.msra.mxu0 0.0
    %313 = vmatprep.subr.mxu0 0.0
    %314 = vmatpush1.msra.mxu0 0.0
    %315 = vmatprep.subr.mxu0 0.0
    %316 = vmatpush1.msra.mxu0 0.0
    %317 = vmatprep.subr.mxu0 0.0
    %318 = vmatpush1.msra.mxu0 0.0
    %319 = vmatprep.subr.mxu0 0.0
    %320 = vmatpush1.msra.mxu0 0.0
    %321 = vmatprep.mubr.f32.mxu0 0.0
    %322 = vmatmul.mubr.f32.gmra.mrb[0].mxu0 %v255
    %v323 = vpop.f32.mrb[0].mxu0
    %v324 = vadd.f32 %v252, %v323
    %v325 = vpop.f32.mrb[0].mxu0
    %326 = vdwg.mxu0
    %vm327 = vcmask 7168
    %328 = vst.msk [vmem:[%s7] sm:$0xff] %vm327, %v324
    // Predicated region
    $region38: #{tpu_custom_call.1} parent=1 // pred_check
      _
    $region39: #{tpu_custom_call.1} parent=1 // pred_check_branch
      %330 = sbr.rel (0) target = $region41
    $region40: #{tpu_custom_call.1} parent=1 // pred_region
      _
    $region41: #{tpu_custom_call.1} parent=1 // pred_fallthru
      _
    // Predicated region
    $region42: #{tpu_custom_call.1} parent=1 // pred_check
      _
    $region43: #{tpu_custom_call.1} parent=1 // pred_check_branch
      %332 = sbr.rel (0) target = $region45
    $region44: #{tpu_custom_call.1} parent=1 // pred_region
      _
    $region45: #{tpu_custom_call.1} parent=1 // pred_fallthru
      _
    %333 = vsyncpa [#allocation4], 1
    %334 = vsyncpa [#allocation6], 1

</llo_original>
